<compile_context>
chip_gen: v7x
topology: tpu7x:2x2x1
jax: 0.10.0
libtpu: 0.0.40
codegen_flags: <defaults>
</compile_context>

<pallas_src>
import functools
from typing import NamedTuple, Optional

import jax
import jax.numpy as jnp
from jax.experimental import pallas as pl
from jax.experimental.pallas import tpu as pltpu

_LANE = 128
_MIB = 1024 * 1024


def _round_up(x, m):
    return ((x + m - 1) // m) * m


def _physical_vmem_bytes():
    try:
        return int(pltpu.get_tpu_info().vmem_capacity_bytes)
    except Exception:
        return 64 * _MIB  # conservative (v7x-sized) fallback


class FC1Plan(NamedTuple):
    in_features: int
    hidden: int
    f_pad: int
    h_pad: int
    tk: int
    n_k: int               # total K tiles (across all splits)
    n_split: int           # leading "parallel" grid axis (2 -> both v7x TCs)
    vmem_limit_bytes: int
    w1_format: str         # "bf16" | "int8"


def plan_fc1(in_features, hidden, *, n_split=2, w1_format="bf16",
             batch_hint=8, tk_cap=None):
    """Divisor-aware K tiling sized for this chip generation's VMEM."""
    h_pad = _round_up(hidden, _LANE)
    w_bytes = 1 if w1_format == "int8" else 2

    vmem_phys = _physical_vmem_bytes()
    # ~75% of physical: ~48 MiB on v7x (64 MiB), ~96 MiB on v5e/v6e (128 MiB).
    vmem_limit = int(vmem_phys * 3 // 4)
    # Double-buffered streamed tiles get ~70% of the limit; the rest is headroom
    # for the accumulator, output block and Mosaic internal scratch.
    stream_budget = vmem_limit * 7 // 10
    per_k_bytes = 2 * (h_pad * w_bytes + batch_hint * 2)   # double-buffered bytes / K row
    tk_budget = max(stream_budget // per_k_bytes, _LANE)
    if tk_cap is not None:
        tk_budget = min(tk_budget, tk_cap)

    # Lane count of the padded feature axis; make it split evenly across cores,
    # then pick the largest TK (multiple of 128) dividing each split's share so
    # the streamed zero-pad is ~0 (at most n_split*128 - 1 padded columns).
    m = _round_up(max(pl.cdiv(in_features, _LANE), 1), n_split)
    per = m // n_split
    d_max = max(min(tk_budget // _LANE, per), 1)
    d = max(dd for dd in range(1, d_max + 1) if per % dd == 0)
    tk = d * _LANE
    return FC1Plan(in_features, hidden, m * _LANE, h_pad, tk, m // d, n_split,
                   vmem_limit, w1_format)


# ---------------------------------------------------------------------------
# Pallas kernel: K-streamed fc1 partial sums (the only non-tiny compute).
# ---------------------------------------------------------------------------
def fc1_stream_kernel(x_ref, w1_ref, partial_ref, acc_ref):
    k = pl.program_id(1)

    @pl.when(k == 0)
    def _init():
        acc_ref[...] = jnp.zeros_like(acc_ref)

    w = w1_ref[...]
    if w.dtype == jnp.int8:
        # int8 weight stream: exact int -> bf16 VPU dequant (per-column scale
        # factors out of the K sum and is applied in the epilogue).
        w = w.astype(jnp.float32).astype(jnp.bfloat16)
    acc_ref[...] += jnp.dot(x_ref[...], w, preferred_element_type=jnp.float32)

    @pl.when(k == pl.num_programs(1) - 1)
    def _finalize():
        partial_ref[...] = acc_ref[...]


def fc1_stream(x, w1, plan: FC1Plan):
    """x: (B, F_pad) bf16. w1: (F_pad, H_pad) bf16/int8. Returns (n_split, B, H_pad) f32."""
    b = x.shape[0]
    n_per_split = plan.n_k // plan.n_split
    w_bytes = jnp.dtype(w1.dtype).itemsize

    flops = 2 * b * plan.f_pad * plan.h_pad
    bytes_accessed = (plan.f_pad * plan.h_pad * w_bytes      # streamed weights
                      + b * plan.f_pad * 2                   # streamed activations
                      + plan.n_split * b * plan.h_pad * 4)   # partial outputs

    return pl.pallas_call(
        fc1_stream_kernel,
        out_shape=jax.ShapeDtypeStruct((plan.n_split, b, plan.h_pad), jnp.float32),
        grid_spec=pltpu.PrefetchScalarGridSpec(
            num_scalar_prefetch=0,
            grid=(plan.n_split, n_per_split),
            in_specs=[
                pl.BlockSpec((b, plan.tk),
                             lambda c, k: (0, c * n_per_split + k)),       # x slab
                pl.BlockSpec((plan.tk, plan.h_pad),
                             lambda c, k: (c * n_per_split + k, 0)),       # w1 tile
            ],
            out_specs=pl.BlockSpec((None, b, plan.h_pad),
                                   lambda c, k: (c, 0, 0)),                # per-split partial
            scratch_shapes=[pltpu.VMEM((b, plan.h_pad), jnp.float32)],
        ),
        compiler_params=pltpu.CompilerParams(
            dimension_semantics=("parallel", "arbitrary"),
            vmem_limit_bytes=plan.vmem_limit_bytes,
        ),
        cost_estimate=pl.CostEstimate(flops=flops, transcendentals=0,
                                      bytes_accessed=bytes_accessed),
    )(x, w1)


# ---------------------------------------------------------------------------
# One-time parameter prep from PyTorch-layout (out, in) weights.
# ---------------------------------------------------------------------------
def prepare_params(plan: FC1Plan, fc1_w, fc1_b, fc2_w, fc2_b, cls_w, cls_b):
    hidden, in_features = fc1_w.shape
    assert (in_features, hidden) == (plan.in_features, plan.hidden)
    w1_t = fc1_w.T.astype(jnp.float32)                        # (F, hidden)

    if plan.w1_format == "int8":
        scale = jnp.maximum(jnp.max(jnp.abs(w1_t), axis=0), 1e-12) / 127.0
        q = jnp.clip(jnp.round(w1_t / scale), -127, 127).astype(jnp.int8)
        w1 = jnp.zeros((plan.f_pad, plan.h_pad), jnp.int8)
        w1 = w1.at[:in_features, :hidden].set(q)
        w1_scale: Optional[jax.Array] = scale.astype(jnp.float32)   # (hidden,)
    else:
        w1 = jnp.zeros((plan.f_pad, plan.h_pad), jnp.bfloat16)
        w1 = w1.at[:in_features, :hidden].set(w1_t.astype(jnp.bfloat16))
        w1_scale = None

    return dict(
        w1=w1, w1_scale=w1_scale,
        b1=fc1_b.astype(jnp.float32),
        w2=fc2_w.T.astype(jnp.float32), b2=fc2_b.astype(jnp.float32),
        w3=cls_w.T.astype(jnp.float32), b3=cls_b.astype(jnp.float32),
    )


# ---------------------------------------------------------------------------
# ImageDiscriminator forward: flatten -> concat -> fc1 (Pallas) -> tiny epilogue.
# ---------------------------------------------------------------------------
@functools.partial(jax.jit, static_argnames=("plan",))
def image_discriminator_forward(image_features, caption_feature, params, *, plan):
    """image_features: list of (B, S_img, D); caption_feature: (B, S_cap, D)."""
    feats = [caption_feature] + list(image_features)
    # bf16 BEFORE flatten/concat halves wrapper-side x traffic; real batch kept.
    flat = [f.astype(jnp.bfloat16).reshape(f.shape[0], -1) for f in feats]   # nn.Flatten
    x = jnp.concatenate(flat, axis=1)                                        # torch.cat dim=1
    b, f = x.shape
    assert f == plan.in_features, "params/plan prepared for a different feature size"
    x = jnp.pad(x, ((0, 0), (0, plan.f_pad - f)))   # <= n_split*128 cols of pad

    partials = fc1_stream(x, params["w1"], plan)            # (n_split, B, H_pad) f32
    pre = jnp.sum(partials, axis=0)[:, :plan.hidden]        # combine TC partials
    if params["w1_scale"] is not None:
        pre = pre * params["w1_scale"]                       # int8 per-column dequant
    h1 = jnp.maximum(pre + params["b1"], 0.0)                # fc1_image + relu1_image
    h2 = jnp.maximum(h1 @ params["w2"] + params["b2"], 0.0)  # fc2_image + relu2_image
    return h2 @ params["w3"] + params["b3"]                  # classifier_image


def init_linear(key, out_f, in_f):
    """Deterministic nn.Linear-style init: U(-1/sqrt(in), 1/sqrt(in))."""
    kw, kb = jax.random.split(key)
    bound = 1.0 / (in_f ** 0.5)
    w = jax.random.uniform(kw, (out_f, in_f), jnp.float32, -bound, bound)
    b = jax.random.uniform(kb, (out_f,), jnp.float32, -bound, bound)
    return w, b


if __name__ == "__main__":
    # Small shapes consistent with the module structure.
    B = 2                      # batch
    N_CAND = 2                 # number_of_candidates
    HIDDEN = 128               # hidden_layer_size
    IMG_SEQ, CAP_SEQ, D = 8, 16, 16
    IN_FEATURES = IMG_SEQ * D * N_CAND + CAP_SEQ * D   # stands in for 151296*n + 393216

    key = jax.random.PRNGKey(0)
    k_img, k_cap, k1, k2, k3 = jax.random.split(key, 5)

    # TODO(synk): ViT / XLM-Roberta backbone outputs replaced by synthetic features.
    image_features = [
        jax.random.normal(jax.random.fold_in(k_img, i), (B, IMG_SEQ, D), jnp.float32)
        for i in range(N_CAND)
    ]
    caption_feature = jax.random.normal(k_cap, (B, CAP_SEQ, D), jnp.float32)

    fc1_w, fc1_b = init_linear(k1, HIDDEN, IN_FEATURES)
    fc2_w, fc2_b = init_linear(k2, HIDDEN, HIDDEN)
    cls_w, cls_b = init_linear(k3, N_CAND, HIDDEN)

    # Reference path (f32, PyTorch layout) with the same operand roundings.
    flat = [caption_feature.reshape(B, -1)] + [f.reshape(B, -1) for f in image_features]
    x_f32 = jnp.concatenate(flat, axis=1)
    x_bf = x_f32.astype(jnp.bfloat16).astype(jnp.float32)

    def reference(w1_eff):          # w1_eff: (HIDDEN, F) effective fc1 weights
        h1 = jnp.maximum(x_bf @ w1_eff.T + fc1_b, 0.0)
        h2 = jnp.maximum(h1 @ fc2_w.T + fc2_b, 0.0)
        return h2 @ cls_w.T + cls_b

    for fmt in ("bf16", "int8"):
        # tk_cap=128 keeps tiles tiny so the toy shapes still exercise the split +
        # K-tiled accumulation pipeline (2 splits x 2 K steps).  At real sizes
        # leave tk_cap=None and the plan picks TK from the chip's VMEM.
        plan = plan_fc1(IN_FEATURES, HIDDEN, n_split=2, w1_format=fmt, tk_cap=128)
        params = prepare_params(plan, fc1_w, fc1_b, fc2_w, fc2_b, cls_w, cls_b)
        out = image_discriminator_forward(image_features, caption_feature, params,
                                          plan=plan)
        out = jax.block_until_ready(out)
        assert out.shape == (B, N_CAND), out.shape

        if fmt == "int8":
            w1_eff = (params["w1"][:IN_FEATURES, :HIDDEN].astype(jnp.float32)
                      * params["w1_scale"]).T
        else:
            w1_eff = fc1_w.astype(jnp.bfloat16).astype(jnp.float32)
        ref = reference(w1_eff)
        err = float(jnp.max(jnp.abs(out - ref)))
        assert jnp.allclose(out, ref, atol=2e-3, rtol=2e-3), (fmt, err)

    print("KERNEL_OK")
</pallas_src>

<mosaic_0001>
module attributes {stable_mosaic.version = 11 : i64} {
  func.func @fc1_stream_kernel(%arg0: i32, %arg1: i32, %arg2: memref<2x128xbf16, #tpu.memory_space<vmem>>, %arg3: memref<128x128xbf16, #tpu.memory_space<vmem>>, %arg4: memref<1x2x128xf32, #tpu.memory_space<vmem>>, %arg5: memref<2x128xf32, #tpu.memory_space<vmem>>) attributes {dimension_semantics = [#tpu.dimension_semantics<parallel>, #tpu.dimension_semantics<arbitrary>], iteration_bounds = array<i64: 2, 2>, scalar_prefetch = 0 : i64, scratch_operands = 1 : i64, tpu.core_type = #tpu.core_type<tc>, window_params = [{transform_indices = @transform_0, window_bounds = array<i64: 2, 128>}, {transform_indices = @transform_1, window_bounds = array<i64: 128, 128>}, {transform_indices = @transform_2, window_bounds = array<i64: 1, 2, 128>}]} {
    %c0_i32 = arith.constant 0 : i32
    %0 = arith.cmpi eq, %arg1, %c0_i32 : i32
    %1 = arith.extui %0 : i1 to i32
    %c0_i32_0 = arith.constant 0 : i32
    %2 = arith.cmpi ne, %1, %c0_i32_0 : i32
    scf.if %2 {
      %cst_9 = arith.constant 0.000000e+00 : f32
      %12 = vector.broadcast %cst_9 : f32 to vector<2x128xf32>
      %c0_10 = arith.constant 0 : index
      %c0_11 = arith.constant 0 : index
      %13 = vector.load %arg5[%c0_10, %c0_11] : memref<2x128xf32, #tpu.memory_space<vmem>>, vector<2x128xf32>
      tpu.vector_store %arg5[%c0_10, %c0_11], %12 {strides = array<i32>} : memref<2x128xf32, #tpu.memory_space<vmem>>, vector<2x128xf32>,
    } else {
    }
    %c0 = arith.constant 0 : index
    %c0_1 = arith.constant 0 : index
    %3 = vector.load %arg3[%c0, %c0_1] : memref<128x128xbf16, #tpu.memory_space<vmem>>, vector<128x128xbf16>
    %c0_2 = arith.constant 0 : index
    %c0_3 = arith.constant 0 : index
    %4 = vector.load %arg5[%c0_2, %c0_3] : memref<2x128xf32, #tpu.memory_space<vmem>>, vector<2x128xf32>
    %c0_4 = arith.constant 0 : index
    %c0_5 = arith.constant 0 : index
    %5 = vector.load %arg2[%c0_4, %c0_5] : memref<2x128xbf16, #tpu.memory_space<vmem>>, vector<2x128xbf16>
    %cst = arith.constant dense<0.000000e+00> : vector<2x128xf32>
    %6 = tpu.matmul %5, %3, %cst {dimension_numbers = #tpu.dot_dimension_numbers<[1], [0], [0], [1], [0, 0, 1, 1], [], []>} : vector<2x128xbf16>, vector<128x128xbf16>, vector<2x128xf32> -> vector<2x128xf32>
    %7 = arith.addf %4, %6 : vector<2x128xf32>
    %c0_6 = arith.constant 0 : index
    %c0_7 = arith.constant 0 : index
    %8 = vector.load %arg5[%c0_6, %c0_7] : memref<2x128xf32, #tpu.memory_space<vmem>>, vector<2x128xf32>
    tpu.vector_store %arg5[%c0_6, %c0_7], %7 {strides = array<i32>} : memref<2x128xf32, #tpu.memory_space<vmem>>, vector<2x128xf32>,
    %c1_i32 = arith.constant 1 : i32
    %9 = arith.cmpi eq, %arg1, %c1_i32 : i32
    %10 = arith.extui %9 : i1 to i32
    %c0_i32_8 = arith.constant 0 : i32
    %11 = arith.cmpi ne, %10, %c0_i32_8 : i32
    scf.if %11 {
      %c0_9 = arith.constant 0 : index
      %c0_10 = arith.constant 0 : index
      %12 = vector.load %arg5[%c0_9, %c0_10] : memref<2x128xf32, #tpu.memory_space<vmem>>, vector<2x128xf32>
      %c0_11 = arith.constant 0 : index
      %c0_12 = arith.constant 0 : index
      %c0_13 = arith.constant 0 : index
      %13 = vector.load %arg4[%c0_11, %c0_12, %c0_13] : memref<1x2x128xf32, #tpu.memory_space<vmem>>, vector<1x2x128xf32>
      %14 = vector.shape_cast %13 : vector<1x2x128xf32> to vector<2x128xf32>
      %15 = vector.shape_cast %12 : vector<2x128xf32> to vector<1x2x128xf32>
      tpu.vector_store %arg4[%c0_11, %c0_12, %c0_13], %15 {strides = array<i32>} : memref<1x2x128xf32, #tpu.memory_space<vmem>>, vector<1x2x128xf32>,
    } else {
    }
    return
  }
  func.func @transform_0(%arg0: i32, %arg1: i32) -> (i32, i32) {
    %c2_i32 = arith.constant 2 : i32
    %0 = arith.muli %arg0, %c2_i32 : i32
    %1 = arith.addi %0, %arg1 : i32
    %c0_i32 = arith.constant 0 : i32
    %c0_i32_0 = arith.constant 0 : i32
    return %c0_i32, %1 : i32, i32
  }
  func.func @transform_1(%arg0: i32, %arg1: i32) -> (i32, i32) {
    %c2_i32 = arith.constant 2 : i32
    %0 = arith.muli %arg0, %c2_i32 : i32
    %1 = arith.addi %0, %arg1 : i32
    %c0_i32 = arith.constant 0 : i32
    %c0_i32_0 = arith.constant 0 : i32
    return %1, %c0_i32 : i32, i32
  }
  func.func @transform_2(%arg0: i32, %arg1: i32) -> (i32, i32, i32) {
    %c0_i32 = arith.constant 0 : i32
    %c0_i32_0 = arith.constant 0 : i32
    %c0_i32_1 = arith.constant 0 : i32
    return %arg0, %c0_i32, %c0_i32_0 : i32, i32, i32
  }
}

</mosaic_0001>

<llo_original>
// kernel: image_discriminator_forward.1
$region0: #{image_discriminator_forward.1}
  #allocation0 [shape = 'u32[]', space=smem, size = 0x4, offset = 0x4, fixed_abs, tag = 'smem constant byte address 0x4 - core index']
  #allocation1 [shape = 'u32[144,128]{1,0:T(1,128)}', space=vmem, size = 0x12000, scoped, tag = 'internal scratch']
  #allocation2 [shape = 'f32[2,128]{1,0:T(2,128)}', space=vmem, size = 0x400, scoped, tag = 'scratch operand']
  %s0 = inlined_call_operand.vmem [shape: bf16[2,512], index: 0, kind: input, shape index: {}]
  %s1 = inlined_call_operand.hbm [shape: bf16[512,128], index: 1, kind: input, shape index: {}]
  %s2 = inlined_call_operand.vmem [shape: f32[2,2,128], index: 2, kind: output, shape index: {}]
  %s3 = sld [smem:[#allocation0]]
  $region53: #{image_discriminator_forward.1} parent=0
    _
  %s5 = ssub.s32 1, %s3
  %s6 = scalar_select 0, %s5, %s3
  $region1: #{image_discriminator_forward.1} parent=0
    #allocation3 [shape = 'u8[65536]{0}', space=vmem, size = 0x10000, scoped, tag = 'input window, operand 1']
    #allocation4 [shape = 's32[2]{0}', space=sflag, size = 0x8, scoped, tag = 'scoped memory for image_discriminator_forward.1']
    %7 = vsyncpa [#allocation4], 0
    %s8 = scalar_lea.sflag [#allocation4], 1
    %9 = vsyncpa %s8, 0
    loop: start=0, step=1, limit=6
    $region2: #{image_discriminator_forward.1} parent=1 // loop_pre_header
      _
    $region3: #{image_discriminator_forward.1} parent=1 // loop_header
      %s11 = sphi 0, %s15
      %p12 = scmp.ge.s32.totalorder %s11, 6
      %s18 = sphi 0, %s30
      %s19 = sphi 0, %s26
      %s20 = sphi 0, %s18
      %s21 = sphi 0, %s19
      %s22 = sphi 0, %s20
      %s23 = sphi 0, %s21
      %s37 = sphi 0, %s39
      %s40 = sphi 0, %s37
      %s41 = sphi 0, %s40
      %s57 = sphi 0, %s41
      %s67 = sphi 0, %s69
      %s70 = sphi 0, %s67
      %s71 = sphi 0, %s70
      %s87 = sphi 0, %s71
      %s93 = sphi 0, %s95
      %s96 = sphi 0, %s93
      %s97 = sphi 0, %s96
      %s113 = sphi 0, %s97
    $region4: #{image_discriminator_forward.1} parent=1 // loop_header_branch
      %14 = sbr.rel (%p12) target = $region8
    $region5: #{image_discriminator_forward.1} parent=1 // loop_body
      %s16 = ssub.s32 %s11, 1
      %s17 = ssub.s32 %s11, 2
      %s24 = sadd.s32 1, %s19
      %p25 = scmp.ge.s32.totalorder %s24, 2
      %s26 = scalar_select %p25, 0, %s24
      %s27 = sadd.s32 1, %s18
      %s28 = scalar_select %p25, %s27, %s18
      %p29 = scmp.ge.s32.totalorder %s28, 2
      %s30 = scalar_select %p29, 0, %s28
      %s31 = smul.u32 %s18, 2
      %s32 = sadd.s32 %s31, %s19
      %s33 = smul.u32 %s30, 2
      %s34 = sadd.s32 %s33, %s26
      %s35 = ssub.s32 %s32, %s34
      %p36 = scmp.eq.s32.totalorder %s35, 0
      %s38 = sadd.s32 %s37, 1
      %s39 = scalar_select %p36, %s37, %s38
      %p42 = pneg %p36
      %p43 = scmp.eq.s32.totalorder %s11, 3
      %p44 = por %p42, %p43
      %p45 = scmp.ne.s32.totalorder %s37, %s40
      %p46 = scmp.eq.s32.totalorder %s11, 0
      %p47 = por %p45, %p46
      %p48 = scmp.ne.s32.totalorder %s37, %s40
      %p49 = scmp.eq.s32.totalorder %s16, 3
      %p50 = por %p48, %p49
      %p51 = scmp.ne.s32.totalorder %s40, %s41
      %p52 = scmp.eq.s32.totalorder %s16, 0
      %p53 = por %p51, %p52
      %p54 = scmp.ne.s32.totalorder %s40, %s41
      %p55 = scmp.eq.s32.totalorder %s17, 3
      %p56 = por %p54, %p55
      %p58 = scmp.ne.s32.totalorder %s41, %s57
      %p59 = scmp.eq.s32.totalorder %s17, 0
      %p60 = por %p58, %p59
      %s61 = smul.u32 %s18, 2
      %s62 = sadd.s32 %s61, %s19
      %s63 = smul.u32 %s30, 2
      %s64 = sadd.s32 %s63, %s26
      %s65 = ssub.s32 %s62, %s64
      %p66 = scmp.eq.s32.totalorder %s65, 0
      %s68 = sadd.s32 %s67, 1
      %s69 = scalar_select %p66, %s67, %s68
      %p72 = pneg %p66
      %p73 = scmp.eq.s32.totalorder %s11, 3
      %p74 = por %p72, %p73
      %p75 = scmp.ne.s32.totalorder %s67, %s70
      %p76 = scmp.eq.s32.totalorder %s11, 0
      %p77 = por %p75, %p76
      %p78 = scmp.ne.s32.totalorder %s67, %s70
      %p79 = scmp.eq.s32.totalorder %s16, 3
      %p80 = por %p78, %p79
      %p81 = scmp.ne.s32.totalorder %s70, %s71
      %p82 = scmp.eq.s32.totalorder %s16, 0
      %p83 = por %p81, %p82
      %p84 = scmp.ne.s32.totalorder %s70, %s71
      %p85 = scmp.eq.s32.totalorder %s17, 3
      %p86 = por %p84, %p85
      %p88 = scmp.ne.s32.totalorder %s71, %s87
      %p89 = scmp.eq.s32.totalorder %s17, 0
      %p90 = por %p88, %p89
      %s91 = ssub.s32 %s18, %s30
      %p92 = scmp.eq.s32.totalorder %s91, 0
      %s94 = sadd.s32 %s93, 1
      %s95 = scalar_select %p92, %s93, %s94
      %p98 = pneg %p92
      %p99 = scmp.eq.s32.totalorder %s11, 3
      %p100 = por %p98, %p99
      %p101 = scmp.ne.s32.totalorder %s93, %s96
      %p102 = scmp.eq.s32.totalorder %s11, 0
      %p103 = por %p101, %p102
      %p104 = scmp.ne.s32.totalorder %s93, %s96
      %p105 = scmp.eq.s32.totalorder %s16, 3
      %p106 = por %p104, %p105
      %p107 = scmp.ne.s32.totalorder %s96, %s97
      %p108 = scmp.eq.s32.totalorder %s16, 0
      %p109 = por %p107, %p108
      %p110 = scmp.ne.s32.totalorder %s96, %s97
      %p111 = scmp.eq.s32.totalorder %s17, 3
      %p112 = por %p110, %p111
      %p114 = scmp.ne.s32.totalorder %s97, %s113
      %p115 = scmp.eq.s32.totalorder %s17, 0
      %p116 = por %p114, %p115
      %p117 = scmp.le.s32.totalorder 1, %s11
      %p118 = scmp.lt.s32.totalorder %s11, 5
      %p119 = pnand %p117, %p118
      %p120 = pneg %p119
      // Predicated region
      $region9: #{image_discriminator_forward.1} parent=5 // pred_check
        _
      $region10: #{image_discriminator_forward.1} parent=5 // pred_check_branch
        %122 = sbr.rel (%p119) target = $region12
      $region11: #{image_discriminator_forward.1} parent=5 // pred_region
        %s123 = ssub.s32 %s11, 1
      $region12: #{image_discriminator_forward.1} parent=5 // pred_fallthru
        _
      %p124 = scmp.lt.s32.totalorder %s11, 4
      // Predicated region
      $region13: #{image_discriminator_forward.1} parent=5 // pred_check
        %p125 = pneg %p124
      $region14: #{image_discriminator_forward.1} parent=5 // pred_check_branch
        %127 = sbr.rel (%p125) target = $region16
      $region15: #{image_discriminator_forward.1} parent=5 // pred_region
        // Predicated region
        $region17: #{image_discriminator_forward.1} parent=15 // pred_check
          %p128 = pneg %p47
        $region18: #{image_discriminator_forward.1} parent=15 // pred_check_branch
          %130 = sbr.rel (%p128) target = $region20
        $region19: #{image_discriminator_forward.1} parent=15 // pred_region
          %s131 = smul.u32 %s18, 2
          %s132 = sadd.s32 %s131, %s19
          %p133 = scmp.lt.s32.totalorder %s132, 3
          %s134 = scalar_select %p133, %s132, 3
          %s135 = scalar_lea.vmem %s0, %s134
          %s136 = smul.u32 %s18, 2
          %s137 = sadd.s32 %s136, %s19
        $region20: #{image_discriminator_forward.1} parent=15 // pred_fallthru
          _
        // Predicated region
        $region21: #{image_discriminator_forward.1} parent=15 // pred_check
          %p138 = pneg %p77
        $region22: #{image_discriminator_forward.1} parent=15 // pred_check_branch
          %140 = sbr.rel (%p138) target = $region24
        $region23: #{image_discriminator_forward.1} parent=15 // pred_region
          %s141 = sand.u32 %s67, 1
          %s142 = scalar_lea.sflag [#allocation4], %s141
          %s143 = sand.u32 %s67, 1
          %s144 = smul.addr %s143, 64
          %s145 = scalar_lea.vmem [#allocation3], %s144
          %s146 = smul.u32 %s18, 2
          %s147 = sadd.s32 %s146, %s19
          %s148 = smul.u32 16, %s147
          %s150 = ssub.s32 1024, 1024
          %151 = vsyncadd %s142, %s150
          %s152 = smul.addr %s148, 64
          %s153 = scalar_lea.hbm %s1, %s152
          %s154 = sshll.u32 %s145, 4
          %s155 = int_to_ptr.vmem [resolvable:$true] %s154
          %160 = dma.hbm_to_vmem [thread:$0]  %s153, 1024, %s155, %s142, 64, 64, 4
        $region24: #{image_discriminator_forward.1} parent=15 // pred_fallthru
          _
      $region16: #{image_discriminator_forward.1} parent=5 // pred_fallthru
        _
      %p161 = scmp.le.s32.totalorder 1, %s11
      %p162 = scmp.lt.s32.totalorder %s11, 5
      %p163 = pnand %p161, %p162
      %p164 = pneg %p163
      // Predicated region
      $region25: #{image_discriminator_forward.1} parent=5 // pred_check
        _
      $region26: #{image_discriminator_forward.1} parent=5 // pred_check_branch
        %166 = sbr.rel (%p163) target = $region28
      $region27: #{image_discriminator_forward.1} parent=5 // pred_region
        %s167 = ssub.s32 %s11, 1
        %s168 = sand.u32 %s70, 1
        %s169 = scalar_lea.sflag [#allocation4], %s168
        %s170 = sand.u32 %s70, 1
        %s171 = smul.addr %s170, 64
        %s172 = scalar_lea.vmem [#allocation3], %s171
        // Predicated region
        $region29: #{image_discriminator_forward.1} parent=27 // pred_check
          %p173 = pneg %p83
        $region30: #{image_discriminator_forward.1} parent=27 // pred_check_branch
          %175 = sbr.rel (%p173) target = $region32
        $region31: #{image_discriminator_forward.1} parent=27 // pred_region
          %176 = dma.done %s169, 1024
        $region32: #{image_discriminator_forward.1} parent=27 // pred_fallthru
          _
        %s177 = smul.u32 %s20, 2
        %s178 = sadd.s32 %s177, %s21
        %p179 = scmp.lt.s32.totalorder %s178, 3
        %s180 = scalar_select %p179, %s178, 3
        %s181 = scalar_lea.vmem %s0, %s180
        %p182 = pneg %p53
        %p183 = pneg %p50
        %s184 = sand.u32 %s70, 1
        %s185 = scalar_lea.sflag [#allocation4], %s184
        %s186 = sand.u32 %s70, 1
        %s187 = smul.addr %s186, 64
        %s188 = scalar_lea.vmem [#allocation3], %s187
        %p189 = pneg %p83
        %p190 = pneg %p80
        %p191 = pneg %p109
        %p192 = pneg %p106
        %p193 = scmp.lt.s32.totalorder %s20, 1
        %s194 = scalar_select %p193, %s20, 1
        %s195 = smul.addr %s194, 2
        %s196 = scalar_lea.vmem %s2, %s195
        %s197 = smul.u32 %s20, 2
        %s198 = sadd.s32 %s197, %s21
        %p199 = scmp.lt.s32.totalorder %s198, 3
        %s200 = scalar_select %p199, %s198, 3
        %s201 = scalar_lea.vmem %s0, %s200
        %s202 = smul.u32 %s20, 2
        %s203 = sadd.s32 %s202, %s21
        %s204 = smul.u32 %s20, 2
        %s205 = sadd.s32 %s204, %s21
        %s206 = smul.u32 16, %s205
        %p207 = scmp.lt.s32.totalorder %s20, 1
        %s208 = scalar_select %p207, %s20, 1
        %s209 = smul.addr %s208, 2
        %s210 = scalar_lea.vmem %s2, %s209
        %p212 = scmp.eq.s32.totalorder %s21, 0
        // Predicated region
        $region33: #{image_discriminator_forward.1} parent=27 // pred_check
          %p213 = pneg %p212
        $region34: #{image_discriminator_forward.1} parent=27 // pred_check_branch
          %215 = sbr.rel (%p213) target = $region36
        $region35: #{image_discriminator_forward.1} parent=27 // pred_region
          %216 = vst [vmem:[#allocation2] sm:$0x3] 0.0
        $region36: #{image_discriminator_forward.1} parent=27 // pred_fallthru
          _
        %v217 = vld [vmem:[%s172] sm:$0xf]
        %v218 = vld [vmem:[%s172 + $0x4] sm:$0xf]
        %v219 = vld [vmem:[%s172 + $0x8] sm:$0xf]
        %v220 = vld [vmem:[%s172 + $0xc] sm:$0xf]
        %v221 = vld [vmem:[%s172 + $0x10] sm:$0xf]
        %v222 = vld [vmem:[%s172 + $0x14] sm:$0xf]
        %v223 = vld [vmem:[%s172 + $0x18] sm:$0xf]
        %v224 = vld [vmem:[%s172 + $0x1c] sm:$0xf]
        %v225 = vld [vmem:[%s172 + $0x20] sm:$0xf]
        %v226 = vld [vmem:[%s172 + $0x24] sm:$0xf]
        %v227 = vld [vmem:[%s172 + $0x28] sm:$0xf]
        %v228 = vld [vmem:[%s172 + $0x2c] sm:$0xf]
        %v229 = vld [vmem:[%s172 + $0x30] sm:$0xf]
        %v230 = vld [vmem:[%s172 + $0x34] sm:$0xf]
        %v231 = vld [vmem:[%s172 + $0x38] sm:$0xf]
        %v232 = vld [vmem:[%s172 + $0x3c] sm:$0xf]
        %v233 = vld [vmem:[#allocation2] sm:$0x3]
        %v234 = vld [vmem:[%s201] sm:$0x1]
        %v251 = vunpack.c.l.b16 %v217
        %v252 = vunpack.c.l.b16 %v218
        %v253 = vunpack.c.l.b16 %v219
        %v254 = vunpack.c.l.b16 %v220
        %v255 = vunpack.c.l.b16 %v221
        %v256 = vunpack.c.l.b16 %v222
        %v257 = vunpack.c.l.b16 %v223
        %v258 = vunpack.c.l.b16 %v224
        %v259 = vunpack.c.l.b16 %v225
        %v260 = vunpack.c.l.b16 %v226
        %v261 = vunpack.c.l.b16 %v227
        %v262 = vunpack.c.l.b16 %v228
        %v263 = vunpack.c.l.b16 %v229
        %v264 = vunpack.c.l.b16 %v230
        %v265 = vunpack.c.l.b16 %v231
        %v266 = vunpack.c.l.b16 %v232
        %v267 = vpack.c.b16 %v252, %v251
        %v268 = vpack.c.b16 %v254, %v253
        %v269 = vpack.c.b16 %v256, %v255
        %v270 = vpack.c.b16 %v258, %v257
        %v271 = vpack.c.b16 %v260, %v259
        %v272 = vpack.c.b16 %v262, %v261
        %v273 = vpack.c.b16 %v264, %v263
        %v274 = vpack.c.b16 %v266, %v265
        %283 = vmatprep.subr.bf16.mxu0 0
        %284 = vmatpush1.bf16.msra.mxu0 %v267
        %285 = vmatprep.subr.bf16.mxu0 0
        %286 = vmatpush1.bf16.msra.mxu0 %v268
        %287 = vmatprep.subr.bf16.mxu0 0
        %288 = vmatpush1.bf16.msra.mxu0 %v269
        %289 = vmatprep.subr.bf16.mxu0 0
        %290 = vmatpush1.bf16.msra.mxu0 %v270
        %291 = vmatprep.subr.bf16.mxu0 0
        %292 = vmatpush1.bf16.msra.mxu0 %v271
        %293 = vmatprep.subr.bf16.mxu0 0
        %294 = vmatpush1.bf16.msra.mxu0 %v272
        %295 = vmatprep.subr.bf16.mxu0 0
        %296 = vmatpush1.bf16.msra.mxu0 %v273
        %297 = vmatprep.subr.bf16.mxu0 0
        %298 = vmatpush1.bf16.msra.mxu0 %v274
        %299 = vmatprep.subr.bf16.mxu0 0
        %300 = vmatpush1.bf16.msra.mxu0 0
        %301 = vmatprep.subr.bf16.mxu0 0
        %302 = vmatpush1.bf16.msra.mxu0 0
        %303 = vmatprep.subr.bf16.mxu0 0
        %304 = vmatpush1.bf16.msra.mxu0 0
        %305 = vmatprep.subr.bf16.mxu0 0
        %306 = vmatpush1.bf16.msra.mxu0 0
        %307 = vmatprep.subr.bf16.mxu0 0
        %308 = vmatpush1.bf16.msra.mxu0 0
        %309 = vmatprep.subr.bf16.mxu0 0
        %310 = vmatpush1.bf16.msra.mxu0 0
        %311 = vmatprep.subr.bf16.mxu0 0
        %312 = vmatpush1.bf16.msra.mxu0 0
        %313 = vmatprep.subr.bf16.mxu0 0
        %314 = vmatpush1.bf16.msra.mxu0 0
        %315 = vmatprep.mubr.bf16.mxu0 0
        %316 = vmatmul.mubr.bf16.gmra.mrb[0].mxu0 %v234
        %v317 = vpop.f32.mrb[0].mxu0
        %v318 = vadd.f32 0.0, %v317
        %v319 = vpop.f32.mrb[0].mxu0
        %v320 = vpop.f32.mrb[0].mxu0
        %v321 = vpop.f32.mrb[0].mxu0
        %322 = vdwg.mxu0
        %v323 = vadd.f32 %v233, %v318
        %324 = vst [vmem:[#allocation2] sm:$0x3] %v323
        %p325 = scmp.eq.s32.totalorder %s21, 1
        // Predicated region
        $region37: #{image_discriminator_forward.1} parent=27 // pred_check
          %p326 = pneg %p325
        $region38: #{image_discriminator_forward.1} parent=27 // pred_check_branch
          %328 = sbr.rel (%p326) target = $region40
        $region39: #{image_discriminator_forward.1} parent=27 // pred_region
          %v329 = vld [vmem:[#allocation2] sm:$0x3]
          %330 = vst [vmem:[%s210] sm:$0x3] %v329
        $region40: #{image_discriminator_forward.1} parent=27 // pred_fallthru
          _
        %p331 = scmp.lt.s32.totalorder %s20, 1
        %s332 = scalar_select %p331, %s20, 1
        %s333 = smul.addr %s332, 2
        %s334 = scalar_lea.vmem %s2, %s333
        // Predicated region
        $region41: #{image_discriminator_forward.1} parent=27 // pred_check
          %p335 = pneg %p106
        $region42: #{image_discriminator_forward.1} parent=27 // pred_check_branch
          %337 = sbr.rel (%p335) target = $region44
        $region43: #{image_discriminator_forward.1} parent=27 // pred_region
          _
        $region44: #{image_discriminator_forward.1} parent=27 // pred_fallthru
          _
      $region28: #{image_discriminator_forward.1} parent=5 // pred_fallthru
        _
      %p338 = scmp.le.s32.totalorder 2, %s11
      // Predicated region
      $region45: #{image_discriminator_forward.1} parent=5 // pred_check
        %p339 = pneg %p338
      $region46: #{image_discriminator_forward.1} parent=5 // pred_check_branch
        %341 = sbr.rel (%p339) target = $region48
      $region47: #{image_discriminator_forward.1} parent=5 // pred_region
        %s342 = ssub.s32 %s11, 2
        // Predicated region
        $region49: #{image_discriminator_forward.1} parent=47 // pred_check
          %p343 = pneg %p112
        $region50: #{image_discriminator_forward.1} parent=47 // pred_check_branch
          %345 = sbr.rel (%p343) target = $region52
        $region51: #{image_discriminator_forward.1} parent=47 // pred_region
          %p346 = scmp.lt.s32.totalorder %s22, 1
          %s347 = scalar_select %p346, %s22, 1
          %s348 = smul.addr %s347, 2
          %s349 = scalar_lea.vmem %s2, %s348
        $region52: #{image_discriminator_forward.1} parent=47 // pred_fallthru
          _
      $region48: #{image_discriminator_forward.1} parent=5 // pred_fallthru
        _
    $region6: #{image_discriminator_forward.1} parent=1 // loop_footer
      %s15 = sadd.s32 1, %s11
    $region7: #{image_discriminator_forward.1} parent=1 // loop_footer_branch
      %10 = sbr.rel target = $region3
    $region8: #{image_discriminator_forward.1} parent=1 // loop_exit
      _
    %350 = vsyncpa [#allocation4], 1
    %s351 = scalar_lea.sflag [#allocation4], 1
    %352 = vsyncpa %s351, 1

</llo_original>
